<compile_context>
chip_gen: v5e
topology: v5e:2x2
jax: 0.10.0
libtpu: 0.0.40
codegen_flags: <defaults>
</compile_context>

<pallas_src>
import jax
import jax.numpy as jnp
import numpy as np
from jax.experimental import pallas as pl
from jax.experimental.pallas import tpu as pltpu


def _round_up(x, m):
    return ((x + m - 1) // m) * m


def _pick_tile(n, target, align):
    """Largest tile <= target that is a multiple of `align` and divides n
    (falls back to the full dimension, which is always a legal block)."""
    if n <= target:
        return n
    t = (min(target, n) // align) * align
    while t >= align:
        if n % t == 0:
            return t
        t -= align
    return n


# ---------------------------------------------------------------------------
# Projection kernel: xw = x @ W_padded       ([N, D_in] @ [D_in, D_out_p])
# ---------------------------------------------------------------------------
def _project_kernel(x_ref, w_ref, o_ref):
    o_ref[...] = jnp.dot(
        x_ref[...], w_ref[...], preferred_element_type=jnp.float32
    ).astype(o_ref.dtype)


def _project(x, w_p, *, row_tile, out_dtype):
    n, d_in = x.shape
    d_out_p = w_p.shape[1]
    rt = _pick_tile(n, row_tile, 8)
    return pl.pallas_call(
        _project_kernel,
        out_shape=jax.ShapeDtypeStruct((n, d_out_p), out_dtype),
        grid_spec=pltpu.PrefetchScalarGridSpec(
            num_scalar_prefetch=0,
            grid=(n // rt,),
            in_specs=[
                pl.BlockSpec((rt, d_in), lambda i: (i, 0)),
                pl.BlockSpec((d_in, d_out_p), lambda i: (0, 0)),
            ],
            out_specs=pl.BlockSpec((rt, d_out_p), lambda i: (i, 0)),
        ),
        compiler_params=pltpu.CompilerParams(
            dimension_semantics=("parallel",)),
        cost_estimate=pl.CostEstimate(
            flops=2 * n * d_in * d_out_p,
            transcendentals=0,
            bytes_accessed=4 * (n * d_in + d_in * d_out_p)
            + jnp.dtype(out_dtype).itemsize * n * d_out_p),
    )(x, w_p)


# ---------------------------------------------------------------------------
# Aggregation kernel: out = relu(adj @ xw), K-tiled with f32 accumulator.
# ---------------------------------------------------------------------------
def _aggregate_kernel(adj_ref, xw_ref, o_ref, acc_ref):
    # adj_ref: [row_tile, k_tile]   xw_ref: [k_tile, d_out_p]
    # o_ref:   [row_tile, d_out_p]  acc_ref: [row_tile, d_out_p] f32 scratch
    k = pl.program_id(1)

    @pl.when(k == 0)
    def _():
        acc_ref[...] = jnp.zeros_like(acc_ref)

    acc_ref[...] += jnp.dot(adj_ref[...], xw_ref[...],
                            preferred_element_type=jnp.float32)

    @pl.when(k == pl.num_programs(1) - 1)
    def _():
        # Fused ReLU + lane-dense store (d_out padded to a multiple of 128).
        o_ref[...] = jnp.maximum(acc_ref[...], 0.0).astype(o_ref.dtype)


def graph_conv_sparse(x, weight, adj, *, row_tile=256, k_tile=512):
    """out = relu(adj @ (x @ weight)) — GraphConvSparse forward pass.

    `adj` is streamed in the dtype it is given (pass bf16 for the fast path;
    cast it once where the module is constructed, not per call).
    """
    n, d_in = x.shape
    d_out = weight.shape[1]
    assert adj.shape == (n, n)

    # Lane-dense output: pad output feature dim up to a multiple of 128.
    d_out_p = _round_up(d_out, 128)
    w_p = weight.astype(jnp.float32)
    if d_out_p != d_out:
        w_p = jnp.pad(w_p, ((0, 0), (0, d_out_p - d_out)))

    # Stream both MXU operands of the big matmul in adj's dtype; accumulate
    # in f32.  The projection emits xw directly in that dtype (no cast pass).
    compute_dtype = adj.dtype
    xw = _project(x.astype(jnp.float32), w_p, row_tile=row_tile,
                  out_dtype=compute_dtype)

    rt = _pick_tile(n, row_tile, 8)     # sublane-aligned row tile
    kt = _pick_tile(n, k_tile, 128)     # lane-aligned contraction tile
    grid = (n // rt, n // kt)
    itemsize = jnp.dtype(compute_dtype).itemsize

    out_p = pl.pallas_call(
        _aggregate_kernel,
        out_shape=jax.ShapeDtypeStruct((n, d_out_p), jnp.float32),
        grid_spec=pltpu.PrefetchScalarGridSpec(
            num_scalar_prefetch=0,
            grid=grid,
            in_specs=[
                pl.BlockSpec((rt, kt), lambda i, k: (i, k)),       # adj tile
                pl.BlockSpec((kt, d_out_p), lambda i, k: (k, 0)),  # xw tile
            ],
            out_specs=pl.BlockSpec((rt, d_out_p), lambda i, k: (i, 0)),
            scratch_shapes=[pltpu.VMEM((rt, d_out_p), jnp.float32)],
        ),
        compiler_params=pltpu.CompilerParams(
            # Row blocks are independent -> "parallel" (megacore shards);
            # contraction axis is last and "arbitrary" (accumulator carry).
            dimension_semantics=("parallel", "arbitrary")),
        cost_estimate=pl.CostEstimate(
            flops=2 * n * n * d_out_p,
            transcendentals=0,
            bytes_accessed=itemsize * (n * n + (n // rt) * n * d_out_p)
            + 4 * n * d_out_p),
    )(adj, xw)

    return out_p[:, :d_out] if d_out_p != d_out else out_p


def glorot_init(key, input_dim, output_dim):
    init_range = np.sqrt(6.0 / (input_dim + output_dim))
    return jax.random.uniform(
        key, (input_dim, output_dim), dtype=jnp.float32,
        minval=-init_range, maxval=init_range,
    )


if __name__ == "__main__":
    N, INPUT_DIM, OUTPUT_DIM = 256, 64, 32

    key = jax.random.PRNGKey(0)
    k_x, k_adj, k_w = jax.random.split(key, 3)

    # Deterministic synthetic inputs.
    x = jax.random.normal(k_x, (N, INPUT_DIM), dtype=jnp.float32)
    # Symmetric, normalized dense "adjacency" (as VGAE preprocessing yields).
    a = (jax.random.uniform(k_adj, (N, N)) > 0.9).astype(jnp.float32)
    a = jnp.maximum(a, a.T) + jnp.eye(N, dtype=jnp.float32)
    deg_inv_sqrt = 1.0 / jnp.sqrt(a.sum(axis=1))
    adj = a * deg_inv_sqrt[:, None] * deg_inv_sqrt[None, :]

    weight = glorot_init(k_w, INPUT_DIM, OUTPUT_DIM)

    # Plain-JAX reference (module semantics, default activation = relu).
    ref = jnp.maximum(adj @ (x @ weight), 0.0)

    # Exact (f32-streamed) path; small tiles so both grid axes take
    # multiple steps.
    out_f32 = graph_conv_sparse(x, weight, adj, row_tile=128, k_tile=128)
    out_f32 = jax.block_until_ready(out_f32)
    np.testing.assert_allclose(np.asarray(out_f32), np.asarray(ref),
                               rtol=1e-5, atol=1e-5)

    # bf16 fast path: adj is cast ONCE (it is a fixed module buffer), then
    # streamed in bf16 with f32 accumulation on the MXU.
    adj_bf16 = adj.astype(jnp.bfloat16)
    out_bf16 = graph_conv_sparse(x, weight, adj_bf16,
                                 row_tile=128, k_tile=128)
    out_bf16 = jax.block_until_ready(out_bf16)
    np.testing.assert_allclose(np.asarray(out_bf16), np.asarray(ref),
                               rtol=2e-2, atol=2e-2)

    print("KERNEL_OK")
</pallas_src>

<mosaic_0001>
module attributes {stable_mosaic.version = 11 : i64} {
  func.func @_project_kernel(%arg0: i32, %arg1: memref<128x64xf32, #tpu.memory_space<vmem>>, %arg2: memref<64x128xf32, #tpu.memory_space<vmem>>, %arg3: memref<128x128xf32, #tpu.memory_space<vmem>>) attributes {dimension_semantics = [#tpu.dimension_semantics<parallel>], iteration_bounds = array<i64: 2>, scalar_prefetch = 0 : i64, scratch_operands = 0 : i64, tpu.core_type = #tpu.core_type<tc>, window_params = [{transform_indices = @transform_0, window_bounds = array<i64: 128, 64>}, {pipeline_mode = #tpu.pipeline_mode<synchronous>, transform_indices = @transform_1, window_bounds = array<i64: 64, 128>}, {transform_indices = @transform_2, window_bounds = array<i64: 128, 128>}]} {
    %c0 = arith.constant 0 : index
    %c0_0 = arith.constant 0 : index
    %0 = vector.load %arg1[%c0, %c0_0] : memref<128x64xf32, #tpu.memory_space<vmem>>, vector<128x64xf32>
    %c0_1 = arith.constant 0 : index
    %c0_2 = arith.constant 0 : index
    %1 = vector.load %arg2[%c0_1, %c0_2] : memref<64x128xf32, #tpu.memory_space<vmem>>, vector<64x128xf32>
    %cst = arith.constant dense<0.000000e+00> : vector<128x128xf32>
    %2 = tpu.matmul %0, %1, %cst {dimension_numbers = #tpu.dot_dimension_numbers<[1], [0], [0], [1], [0, 0, 1, 1], [], []>} : vector<128x64xf32>, vector<64x128xf32>, vector<128x128xf32> -> vector<128x128xf32>
    %c0_3 = arith.constant 0 : index
    %c0_4 = arith.constant 0 : index
    %3 = vector.load %arg3[%c0_3, %c0_4] : memref<128x128xf32, #tpu.memory_space<vmem>>, vector<128x128xf32>
    tpu.vector_store %arg3[%c0_3, %c0_4], %2 {strides = array<i32>} : memref<128x128xf32, #tpu.memory_space<vmem>>, vector<128x128xf32>,
    return
  }
  func.func @transform_0(%arg0: i32) -> (i32, i32) {
    %c0_i32 = arith.constant 0 : i32
    %c0_i32_0 = arith.constant 0 : i32
    return %arg0, %c0_i32 : i32, i32
  }
  func.func @transform_1(%arg0: i32) -> (i32, i32) {
    %c0_i32 = arith.constant 0 : i32
    %c0_i32_0 = arith.constant 0 : i32
    %c0_i32_1 = arith.constant 0 : i32
    return %c0_i32, %c0_i32_0 : i32, i32
  }
  func.func @transform_2(%arg0: i32) -> (i32, i32) {
    %c0_i32 = arith.constant 0 : i32
    %c0_i32_0 = arith.constant 0 : i32
    return %arg0, %c0_i32 : i32, i32
  }
}

</mosaic_0001>

<llo_original>
// kernel: tpu_custom_call.1
$region0: #{tpu_custom_call.1}
  #allocation0 [shape = 'u32[]', space=smem, size = 0x4, offset = 0x4, fixed_abs, tag = 'smem constant byte address 0x4 - core index']
  #allocation1 [shape = 'u32[72,128]{1,0:T(1,128)}', space=vmem, size = 0x9000, scoped, tag = 'internal scratch']
  %s0 = inlined_call_operand.vmem [shape: f32[256,64], index: 0, kind: input, shape index: {}]
  %s1 = inlined_call_operand.vmem [shape: f32[64,128], index: 1, kind: input, shape index: {}]
  %s2 = inlined_call_operand.hbm [shape: f32[256,128], index: 2, kind: output, shape index: {}]
  %s3 = sld [smem:[#allocation0]]
  $region41: #{tpu_custom_call.1} parent=0
    _
  %s5 = ssub.s32 1, %s3
  %s6 = scalar_select 0, %s5, %s3
  $region1: #{tpu_custom_call.1} parent=0
    #allocation2 [shape = 'u8[131072]{0}', space=vmem, size = 0x20000, scoped, tag = 'output window, operand 0']
    #allocation3 [shape = 's32[2]{0}', space=sflag, size = 0x8, scoped, tag = 'scoped memory for tpu_custom_call.1']
    %7 = vsyncpa [#allocation3], 0
    %s8 = scalar_lea.sflag [#allocation3], 1
    %9 = vsyncpa %s8, 0
    loop: start=0, step=1, limit=4
    $region2: #{tpu_custom_call.1} parent=1 // loop_pre_header
      _
    $region3: #{tpu_custom_call.1} parent=1 // loop_header
      %s11 = sphi 0, %s15
      %p12 = scmp.ge.s32.totalorder %s11, 4
      %s21 = sphi 0, %s23
      %s24 = sphi 0, %s21
      %s25 = sphi 0, %s24
      %s41 = sphi 0, %s25
      %s45 = sphi 0, %s45
      %s47 = sphi 0, %s45
      %s48 = sphi 0, %s47
      %s62 = sphi 0, %s48
      %s68 = sphi 0, %s70
      %s71 = sphi 0, %s68
      %s72 = sphi 0, %s71
      %s88 = sphi 0, %s72
    $region4: #{tpu_custom_call.1} parent=1 // loop_header_branch
      %14 = sbr.rel (%p12) target = $region8
    $region5: #{tpu_custom_call.1} parent=1 // loop_body
      %s16 = ssub.s32 %s11, 1
      %s17 = ssub.s32 %s11, 2
      %s18 = sadd.s32 %s11, 1
      %s19 = ssub.s32 %s11, %s18
      %p20 = scmp.eq.s32.totalorder %s19, 0
      %s22 = sadd.s32 %s21, 1
      %s23 = scalar_select %p20, %s21, %s22
      %p26 = pneg %p20
      %p27 = scmp.eq.s32.totalorder %s11, 1
      %p28 = por %p26, %p27
      %p29 = scmp.ne.s32.totalorder %s21, %s24
      %p30 = scmp.eq.s32.totalorder %s11, 0
      %p31 = por %p29, %p30
      %p32 = scmp.ne.s32.totalorder %s21, %s24
      %p33 = scmp.eq.s32.totalorder %s16, 1
      %p34 = por %p32, %p33
      %p35 = scmp.ne.s32.totalorder %s24, %s25
      %p36 = scmp.eq.s32.totalorder %s16, 0
      %p37 = por %p35, %p36
      %p38 = scmp.ne.s32.totalorder %s24, %s25
      %p39 = scmp.eq.s32.totalorder %s17, 1
      %p40 = por %p38, %p39
      %p42 = scmp.ne.s32.totalorder %s25, %s41
      %p43 = scmp.eq.s32.totalorder %s17, 0
      %p44 = por %p42, %p43
      %s46 = sadd.s32 %s45, 1
      %p49 = scmp.eq.s32.totalorder %s11, 1
      %p50 = scmp.ne.s32.totalorder %s45, %s47
      %p51 = scmp.eq.s32.totalorder %s11, 0
      %p52 = por %p50, %p51
      %p53 = scmp.ne.s32.totalorder %s45, %s47
      %p54 = scmp.eq.s32.totalorder %s16, 1
      %p55 = por %p53, %p54
      %p56 = scmp.ne.s32.totalorder %s47, %s48
      %p57 = scmp.eq.s32.totalorder %s16, 0
      %p58 = por %p56, %p57
      %p59 = scmp.ne.s32.totalorder %s47, %s48
      %p60 = scmp.eq.s32.totalorder %s17, 1
      %p61 = por %p59, %p60
      %p63 = scmp.ne.s32.totalorder %s48, %s62
      %p64 = scmp.eq.s32.totalorder %s17, 0
      %p65 = por %p63, %p64
      %s66 = ssub.s32 %s11, %s18
      %p67 = scmp.eq.s32.totalorder %s66, 0
      %s69 = sadd.s32 %s68, 1
      %s70 = scalar_select %p67, %s68, %s69
      %p73 = pneg %p67
      %p74 = scmp.eq.s32.totalorder %s11, 1
      %p75 = por %p73, %p74
      %p76 = scmp.ne.s32.totalorder %s68, %s71
      %p77 = scmp.eq.s32.totalorder %s11, 0
      %p78 = por %p76, %p77
      %p79 = scmp.ne.s32.totalorder %s68, %s71
      %p80 = scmp.eq.s32.totalorder %s16, 1
      %p81 = por %p79, %p80
      %p82 = scmp.ne.s32.totalorder %s71, %s72
      %p83 = scmp.eq.s32.totalorder %s16, 0
      %p84 = por %p82, %p83
      %p85 = scmp.ne.s32.totalorder %s71, %s72
      %p86 = scmp.eq.s32.totalorder %s17, 1
      %p87 = por %p85, %p86
      %p89 = scmp.ne.s32.totalorder %s72, %s88
      %p90 = scmp.eq.s32.totalorder %s17, 0
      %p91 = por %p89, %p90
      %p92 = scmp.le.s32.totalorder 1, %s11
      %p93 = scmp.lt.s32.totalorder %s11, 3
      %p94 = pnand %p92, %p93
      %p95 = pneg %p94
      // Predicated region
      $region9: #{tpu_custom_call.1} parent=5 // pred_check
        _
      $region10: #{tpu_custom_call.1} parent=5 // pred_check_branch
        %97 = sbr.rel (%p94) target = $region12
      $region11: #{tpu_custom_call.1} parent=5 // pred_region
        %s98 = ssub.s32 %s11, 1
        // Predicated region
        $region13: #{tpu_custom_call.1} parent=11 // pred_check
          %p99 = pneg %p58
        $region14: #{tpu_custom_call.1} parent=11 // pred_check_branch
          %101 = sbr.rel (%p99) target = $region16
        $region15: #{tpu_custom_call.1} parent=11 // pred_region
          _
        $region16: #{tpu_custom_call.1} parent=11 // pred_fallthru
          _
      $region12: #{tpu_custom_call.1} parent=5 // pred_fallthru
        _
      %p102 = scmp.lt.s32.totalorder %s11, 2
      // Predicated region
      $region17: #{tpu_custom_call.1} parent=5 // pred_check
        %p103 = pneg %p102
      $region18: #{tpu_custom_call.1} parent=5 // pred_check_branch
        %105 = sbr.rel (%p103) target = $region20
      $region19: #{tpu_custom_call.1} parent=5 // pred_region
        // Predicated region
        $region21: #{tpu_custom_call.1} parent=19 // pred_check
          %p106 = pneg %p31
        $region22: #{tpu_custom_call.1} parent=19 // pred_check_branch
          %108 = sbr.rel (%p106) target = $region24
        $region23: #{tpu_custom_call.1} parent=19 // pred_region
          %s109 = smul.u32 16, %s11
          %p110 = scmp.lt.s32.totalorder %s109, 31
          %s111 = scalar_select %p110, %s109, 31
          %s112 = smul.addr %s111, 8
          %s113 = scalar_lea.vmem %s0, %s112
          %s114 = smul.u32 16, %s11
        $region24: #{tpu_custom_call.1} parent=19 // pred_fallthru
          _
      $region20: #{tpu_custom_call.1} parent=5 // pred_fallthru
        _
      %p115 = scmp.le.s32.totalorder 1, %s11
      %p116 = scmp.lt.s32.totalorder %s11, 3
      %p117 = pnand %p115, %p116
      %p118 = pneg %p117
      // Predicated region
      $region25: #{tpu_custom_call.1} parent=5 // pred_check
        _
      $region26: #{tpu_custom_call.1} parent=5 // pred_check_branch
        %120 = sbr.rel (%p117) target = $region28
      $region27: #{tpu_custom_call.1} parent=5 // pred_region
        %s121 = ssub.s32 %s11, 1
        %s122 = smul.u32 16, %s16
        %p123 = scmp.lt.s32.totalorder %s122, 31
        %s124 = scalar_select %p123, %s122, 31
        %s125 = smul.addr %s124, 8
        %s126 = scalar_lea.vmem %s0, %s125
        %p127 = pneg %p37
        %p128 = pneg %p34
        %p129 = pneg %p58
        %p130 = pneg %p55
        %p131 = pneg %p84
        %p132 = pneg %p81
        %s133 = sand.u32 %s71, 1
        %s134 = scalar_lea.sflag [#allocation3], %s133
        %s135 = sand.u32 %s71, 1
        %s136 = smul.addr %s135, 128
        %s137 = scalar_lea.vmem [#allocation2], %s136
        %s138 = smul.u32 16, %s16
        %p139 = scmp.lt.s32.totalorder %s138, 31
        %s140 = scalar_select %p139, %s138, 31
        %s141 = smul.addr %s140, 8
        %s142 = scalar_lea.vmem %s0, %s141
        %s143 = smul.u32 16, %s16
        %s144 = smul.u32 16, %s16
        %v145 = vld [vmem:[%s142] sm:$0xff]
        %v146 = vld [vmem:[%s142 + $0x8] sm:$0xff]
        %v147 = vld [vmem:[%s142 + $0x10] sm:$0xff]
        %v148 = vld [vmem:[%s142 + $0x18] sm:$0xff]
        %v149 = vld [vmem:[%s142 + $0x20] sm:$0xff]
        %v150 = vld [vmem:[%s142 + $0x28] sm:$0xff]
        %v151 = vld [vmem:[%s142 + $0x30] sm:$0xff]
        %v152 = vld [vmem:[%s142 + $0x38] sm:$0xff]
        %v153 = vld [vmem:[%s142 + $0x40] sm:$0xff]
        %v154 = vld [vmem:[%s142 + $0x48] sm:$0xff]
        %v155 = vld [vmem:[%s142 + $0x50] sm:$0xff]
        %v156 = vld [vmem:[%s142 + $0x58] sm:$0xff]
        %v157 = vld [vmem:[%s142 + $0x60] sm:$0xff]
        %v158 = vld [vmem:[%s142 + $0x68] sm:$0xff]
        %v159 = vld [vmem:[%s142 + $0x70] sm:$0xff]
        %v160 = vld [vmem:[%s142 + $0x78] sm:$0xff]
        %v161 = vld [vmem:[%s1] sm:$0xff]
        %v162 = vld [vmem:[%s1 + $0x8] sm:$0xff]
        %v163 = vld [vmem:[%s1 + $0x10] sm:$0xff]
        %v164 = vld [vmem:[%s1 + $0x18] sm:$0xff]
        %v165 = vld [vmem:[%s1 + $0x20] sm:$0xff]
        %v166 = vld [vmem:[%s1 + $0x28] sm:$0xff]
        %v167 = vld [vmem:[%s1 + $0x30] sm:$0xff]
        %v168 = vld [vmem:[%s1 + $0x38] sm:$0xff]
        %vm169 = vcmask 523264
        %v171 = vsel %vm169, %v145, 0
        %v174 = vsel %vm169, %v146, 0
        %v177 = vsel %vm169, %v147, 0
        %v180 = vsel %vm169, %v148, 0
        %v183 = vsel %vm169, %v149, 0
        %v186 = vsel %vm169, %v150, 0
        %v189 = vsel %vm169, %v151, 0
        %v192 = vsel %vm169, %v152, 0
        %v195 = vsel %vm169, %v153, 0
        %v198 = vsel %vm169, %v154, 0
        %v201 = vsel %vm169, %v155, 0
        %v204 = vsel %vm169, %v156, 0
        %v207 = vsel %vm169, %v157, 0
        %v210 = vsel %vm169, %v158, 0
        %v213 = vsel %vm169, %v159, 0
        %v216 = vsel %vm169, %v160, 0
        %218 = vmatpush.msra.mxu0 0.0
        %219 = vmatpush.msra.mxu0 0.0
        %220 = vmatpush.msra.mxu0 0.0
        %221 = vmatpush.msra.mxu0 0.0
        %222 = vmatpush.msra.mxu0 0.0
        %223 = vmatpush.msra.mxu0 0.0
        %224 = vmatpush.msra.mxu0 0.0
        %225 = vmatpush.msra.mxu0 0.0
        %226 = vmatpush.msra.mxu0 %v168
        %227 = vmatpush.msra.mxu0 %v167
        %228 = vmatpush.msra.mxu0 %v166
        %229 = vmatpush.msra.mxu0 %v165
        %230 = vmatpush.msra.mxu0 %v164
        %231 = vmatpush.msra.mxu0 %v163
        %232 = vmatpush.msra.mxu0 %v162
        %233 = vmatpush.msra.mxu0 %v161
        %234 = vmatmul.f32.gmra.mxu0 %v171
        %v235 = vpop.f32.mrf.mxu0
        %v236 = vadd.f32 0.0, %v235
        %237 = vmatmul.f32.gmra.mxu0 %v174
        %v238 = vpop.f32.mrf.mxu0
        %v239 = vadd.f32 0.0, %v238
        %240 = vmatmul.f32.gmra.mxu0 %v177
        %v241 = vpop.f32.mrf.mxu0
        %v242 = vadd.f32 0.0, %v241
        %243 = vmatmul.f32.gmra.mxu0 %v180
        %v244 = vpop.f32.mrf.mxu0
        %v245 = vadd.f32 0.0, %v244
        %246 = vmatmul.f32.gmra.mxu0 %v183
        %v247 = vpop.f32.mrf.mxu0
        %v248 = vadd.f32 0.0, %v247
        %249 = vmatmul.f32.gmra.mxu0 %v186
        %v250 = vpop.f32.mrf.mxu0
        %v251 = vadd.f32 0.0, %v250
        %252 = vmatmul.f32.gmra.mxu0 %v189
        %v253 = vpop.f32.mrf.mxu0
        %v254 = vadd.f32 0.0, %v253
        %255 = vmatmul.f32.gmra.mxu0 %v192
        %v256 = vpop.f32.mrf.mxu0
        %v257 = vadd.f32 0.0, %v256
        %258 = vmatmul.f32.gmra.mxu0 %v195
        %v259 = vpop.f32.mrf.mxu0
        %v260 = vadd.f32 0.0, %v259
        %261 = vmatmul.f32.gmra.mxu0 %v198
        %v262 = vpop.f32.mrf.mxu0
        %v263 = vadd.f32 0.0, %v262
        %264 = vmatmul.f32.gmra.mxu0 %v201
        %v265 = vpop.f32.mrf.mxu0
        %v266 = vadd.f32 0.0, %v265
        %267 = vmatmul.f32.gmra.mxu0 %v204
        %v268 = vpop.f32.mrf.mxu0
        %v269 = vadd.f32 0.0, %v268
        %270 = vmatmul.f32.gmra.mxu0 %v207
        %v271 = vpop.f32.mrf.mxu0
        %v272 = vadd.f32 0.0, %v271
        %273 = vmatmul.f32.gmra.mxu0 %v210
        %v274 = vpop.f32.mrf.mxu0
        %v275 = vadd.f32 0.0, %v274
        %276 = vmatmul.f32.gmra.mxu0 %v213
        %v277 = vpop.f32.mrf.mxu0
        %v278 = vadd.f32 0.0, %v277
        %279 = vmatmul.f32.gmra.mxu0 %v216
        %v280 = vpop.f32.mrf.mxu0
        %v281 = vadd.f32 0.0, %v280
        %282 = vdwg.mxu0
        %283 = vst [vmem:[%s137] sm:$0xff] %v236
        %284 = vst [vmem:[%s137 + $0x8] sm:$0xff] %v239
        %285 = vst [vmem:[%s137 + $0x10] sm:$0xff] %v242
        %286 = vst [vmem:[%s137 + $0x18] sm:$0xff] %v245
        %287 = vst [vmem:[%s137 + $0x20] sm:$0xff] %v248
        %288 = vst [vmem:[%s137 + $0x28] sm:$0xff] %v251
        %289 = vst [vmem:[%s137 + $0x30] sm:$0xff] %v254
        %290 = vst [vmem:[%s137 + $0x38] sm:$0xff] %v257
        %291 = vst [vmem:[%s137 + $0x40] sm:$0xff] %v260
        %292 = vst [vmem:[%s137 + $0x48] sm:$0xff] %v263
        %293 = vst [vmem:[%s137 + $0x50] sm:$0xff] %v266
        %294 = vst [vmem:[%s137 + $0x58] sm:$0xff] %v269
        %295 = vst [vmem:[%s137 + $0x60] sm:$0xff] %v272
        %296 = vst [vmem:[%s137 + $0x68] sm:$0xff] %v275
        %297 = vst [vmem:[%s137 + $0x70] sm:$0xff] %v278
        %298 = vst [vmem:[%s137 + $0x78] sm:$0xff] %v281
        %s299 = sand.u32 %s71, 1
        %s300 = scalar_lea.sflag [#allocation3], %s299
        %s301 = sand.u32 %s71, 1
        %s302 = smul.addr %s301, 128
        %s303 = scalar_lea.vmem [#allocation2], %s302
        // Predicated region
        $region29: #{tpu_custom_call.1} parent=27 // pred_check
          %p304 = pneg %p81
        $region30: #{tpu_custom_call.1} parent=27 // pred_check_branch
          %306 = sbr.rel (%p304) target = $region32
        $region31: #{tpu_custom_call.1} parent=27 // pred_region
          %s307 = smul.u32 16, %s16
          %309 = vsyncadd %s300, 0
          %s310 = smul.addr %s307, 8
          %s311 = scalar_lea.hbm %s2, %s310
          %s312 = sshll.u32 %s303, 4
          %s313 = int_to_ptr.vmem [resolvable:$true] %s312
          %s314 = sshll.u32 %s311, 4
          %s315 = int_to_ptr.hbm [resolvable:$true] %s314
          %320 = dma.vmem_to_hbm [thread:$0]  %s313, 2048, %s315, %s300, 128, 128, 8
        $region32: #{tpu_custom_call.1} parent=27 // pred_fallthru
          _
      $region28: #{tpu_custom_call.1} parent=5 // pred_fallthru
        _
      %p321 = scmp.le.s32.totalorder 2, %s11
      // Predicated region
      $region33: #{tpu_custom_call.1} parent=5 // pred_check
        %p322 = pneg %p321
      $region34: #{tpu_custom_call.1} parent=5 // pred_check_branch
        %324 = sbr.rel (%p322) target = $region36
      $region35: #{tpu_custom_call.1} parent=5 // pred_region
        %s325 = ssub.s32 %s11, 2
        // Predicated region
        $region37: #{tpu_custom_call.1} parent=35 // pred_check
          %p326 = pneg %p87
        $region38: #{tpu_custom_call.1} parent=35 // pred_check_branch
          %328 = sbr.rel (%p326) target = $region40
        $region39: #{tpu_custom_call.1} parent=35 // pred_region
          %s329 = sand.u32 %s72, 1
          %s330 = scalar_lea.sflag [#allocation3], %s329
          %s331 = sand.u32 %s72, 1
          %s332 = smul.addr %s331, 128
          %s333 = scalar_lea.vmem [#allocation2], %s332
          %335 = dma.done %s330, 2048
        $region40: #{tpu_custom_call.1} parent=35 // pred_fallthru
          _
      $region36: #{tpu_custom_call.1} parent=5 // pred_fallthru
        _
    $region6: #{tpu_custom_call.1} parent=1 // loop_footer
      %s15 = sadd.s32 1, %s11
    $region7: #{tpu_custom_call.1} parent=1 // loop_footer_branch
      %10 = sbr.rel target = $region3
    $region8: #{tpu_custom_call.1} parent=1 // loop_exit
      _
    %336 = vsyncpa [#allocation3], 1
    %s337 = scalar_lea.sflag [#allocation3], 1
    %338 = vsyncpa %s337, 1

</llo_original>
